<compile_context>
chip_gen: v7x
topology: tpu7x:2x2x1
jax: 0.10.0
libtpu: 0.0.40
codegen_flags: <defaults>
</compile_context>

<pallas_src>
import functools

import jax
import jax.numpy as jnp
import numpy as np
from jax.experimental import pallas as pl
from jax.experimental.pallas import tpu as pltpu


def _round_up(x, m):
    return (x + m - 1) // m * m


def fm_kernel(emb_ref, lin_ref, bias_ref, out_ref):
    """emb_ref: [F, TB, D] bf16 VMEM, lin_ref: [F, TB] bf16 VMEM,
    bias_ref: [1] f32 SMEM, out_ref: [1, TB] f32 VMEM."""
    # Upcast immediately after load (f32 accumulation; v5e has no bf16 VPU).
    emb = emb_ref[...].astype(jnp.float32)               # [F, TB, D]
    lin = lin_ref[...].astype(jnp.float32)               # [F, TB]
    bias = bias_ref[0]

    # ----- field reductions along the leading axis -> plain VPU adds
    sum_f = jnp.sum(emb, axis=0)                          # [TB, D]
    sum_sq = jnp.sum(emb * emb, axis=0)                   # [TB, D]

    # ----- cross term: 0.5 * sum_d((sum_f e)^2 - sum_f e^2)  (one lane reduce)
    cross = 0.5 * jnp.sum(sum_f * sum_f - sum_sq, axis=-1)  # [TB]

    # ----- linear term: sum over fields + bias
    linear = jnp.sum(lin, axis=0) + bias                  # [TB]

    # Lane-dense store: one row of TB results.
    out_ref[...] = jax.nn.sigmoid(linear + cross)[None, :]


@functools.partial(jax.jit, static_argnames=("block_b",))
def fm_forward(x, embed_table, linear_table, bias, offsets, *, block_b=512):
    """x: [B, F] int32 ids. Tables in bf16 (or f32). Returns [B, 1] f32."""
    B, F = x.shape
    D = embed_table.shape[1]

    # Batch tile: large (multiple of 128) for pipelining / lane-dense output;
    # collapse to a single padded tile when B is small.
    block_b = _round_up(block_b, 128)
    tb = min(block_b, _round_up(B, 8))
    num_tiles = pl.cdiv(B, tb)
    b_pad = num_tiles * tb

    # Glue: offset ids, pad the batch (id 0 is a valid row; padded outputs are
    # dropped below), and gather with the field axis leading so the in-kernel
    # block layout is (sublane=batch, lane=D).
    x_off = x + offsets[None, :]                          # [B, F]
    if b_pad != B:
        x_off = jnp.pad(x_off, ((0, b_pad - B), (0, 0)))  # pad with id 0
    x_t = x_off.T                                         # [F, B_pad]
    emb = embed_table[x_t]                                # [F, B_pad, D] bf16
    lin_w = linear_table[x_t, 0]                          # [F, B_pad]    bf16
    bias_arr = jnp.asarray(bias, jnp.float32).reshape(1)

    out_row = pl.pallas_call(
        fm_kernel,
        out_shape=jax.ShapeDtypeStruct((1, b_pad), jnp.float32),
        grid=(num_tiles,),
        in_specs=[
            pl.BlockSpec((F, tb, D), lambda i: (0, i, 0)),
            pl.BlockSpec((F, tb), lambda i: (0, i)),
            pl.BlockSpec(memory_space=pltpu.MemorySpace.SMEM),
        ],
        out_specs=pl.BlockSpec((1, tb), lambda i: (0, i)),
        compiler_params=pltpu.CompilerParams(
            dimension_semantics=("parallel",)),
    )(emb, lin_w, bias_arr)

    return out_row[0, :B].reshape(B, 1)


def fm_reference(x, embed_table, linear_table, bias, offsets):
    """Pure-JAX reference matching the PyTorch forward semantics."""
    x_off = x + offsets[None, :]
    emb = embed_table[x_off].astype(jnp.float32)          # [B, F, D]
    lin_w = linear_table[x_off, 0].astype(jnp.float32)    # [B, F]
    linear = jnp.sum(lin_w, axis=1, keepdims=True) + bias
    sum_f = jnp.sum(emb, axis=1)
    cross = 0.5 * jnp.sum(sum_f ** 2 - jnp.sum(emb ** 2, axis=1),
                          axis=1, keepdims=True)
    return jax.nn.sigmoid(linear + cross)


if __name__ == "__main__":
    # Small synthetic config consistent with the module's forward.
    field_dims = (10, 20, 30, 40)       # 4 fields
    embed_dim = 32
    num_fields = len(field_dims)
    total = sum(field_dims)

    key = jax.random.PRNGKey(0)
    k_emb, k_lin, k_x = jax.random.split(key, 3)

    # Tables stored in bf16 (halved HBM traffic); math is done in f32.
    embed_table = (jax.random.normal(k_emb, (total, embed_dim), jnp.float32)
                   * 0.01).astype(jnp.bfloat16)
    linear_table = (jax.random.normal(k_lin, (total, 1), jnp.float32)
                    * 0.01).astype(jnp.bfloat16)
    bias = jnp.zeros((), jnp.float32)

    offsets = jnp.asarray(
        np.concatenate([[0], np.cumsum(field_dims)[:-1]]).astype(np.int32))

    def make_x(batch, seed_key):
        return jnp.stack(
            [jax.random.randint(jax.random.fold_in(seed_key, f), (batch,), 0,
                                field_dims[f], dtype=jnp.int32)
             for f in range(num_fields)], axis=1)          # [batch, F]

    # ---- small single-tile check (B=2, one padded tile of 8 rows)
    x_small = make_x(2, k_x)
    out_small = jax.block_until_ready(
        fm_forward(x_small, embed_table, linear_table, bias, offsets))
    ref_small = fm_reference(x_small, embed_table, linear_table, bias, offsets)
    np.testing.assert_allclose(np.asarray(out_small), np.asarray(ref_small),
                               rtol=1e-5, atol=1e-6)
    assert out_small.shape == (2, 1)

    # ---- multi-tile, ragged-batch check (B=300, TB=128 -> 3 grid steps)
    x_big = make_x(300, jax.random.fold_in(k_x, 123))
    out_big = jax.block_until_ready(
        fm_forward(x_big, embed_table, linear_table, bias, offsets,
                   block_b=128))
    ref_big = fm_reference(x_big, embed_table, linear_table, bias, offsets)
    np.testing.assert_allclose(np.asarray(out_big), np.asarray(ref_big),
                               rtol=1e-5, atol=1e-6)
    assert out_big.shape == (300, 1)

    print("KERNEL_OK")
</pallas_src>

<mosaic_0001>
module attributes {stable_mosaic.version = 11 : i64} {
  func.func @fm_kernel(%arg0: i32, %arg1: memref<4x8x32xbf16, #tpu.memory_space<vmem>>, %arg2: memref<4x8xbf16, #tpu.memory_space<vmem>>, %arg3: memref<1xf32, #tpu.memory_space<smem>>, %arg4: memref<1x8xf32, #tpu.memory_space<vmem>>) attributes {dimension_semantics = [#tpu.dimension_semantics<parallel>], iteration_bounds = array<i64: 1>, scalar_prefetch = 0 : i64, scratch_operands = 0 : i64, tpu.core_type = #tpu.core_type<tc>, window_params = [{transform_indices = @transform_0, window_bounds = array<i64: 4, 8, 32>}, {transform_indices = @transform_1, window_bounds = array<i64: 4, 8>}, {transform_indices = @transform_2, window_bounds = array<i64: 1>}, {transform_indices = @transform_3, window_bounds = array<i64: 1, 8>}]} {
    %c0 = arith.constant 0 : index
    %c0_0 = arith.constant 0 : index
    %c0_1 = arith.constant 0 : index
    %0 = vector.load %arg1[%c0, %c0_0, %c0_1] : memref<4x8x32xbf16, #tpu.memory_space<vmem>>, vector<4x8x32xbf16>
    %1 = arith.extf %0 : vector<4x8x32xbf16> to vector<4x8x32xf32>
    %c0_2 = arith.constant 0 : index
    %c0_3 = arith.constant 0 : index
    %2 = vector.load %arg2[%c0_2, %c0_3] : memref<4x8xbf16, #tpu.memory_space<vmem>>, vector<4x8xbf16>
    %3 = arith.extf %2 : vector<4x8xbf16> to vector<4x8xf32>
    %c0_4 = arith.constant 0 : index
    %4 = memref.load %arg3[%c0_4] : memref<1xf32, #tpu.memory_space<smem>>
    %cst = arith.constant dense<0.000000e+00> : vector<8x32xf32>
    %5 = vector.multi_reduction <add>, %1, %cst [0] : vector<4x8x32xf32> to vector<8x32xf32>
    %6 = arith.mulf %1, %1 : vector<4x8x32xf32>
    %cst_5 = arith.constant dense<0.000000e+00> : vector<8x32xf32>
    %7 = vector.multi_reduction <add>, %6, %cst_5 [0] : vector<4x8x32xf32> to vector<8x32xf32>
    %8 = arith.mulf %5, %5 : vector<8x32xf32>
    %9 = arith.subf %8, %7 : vector<8x32xf32>
    %cst_6 = arith.constant dense<0.000000e+00> : vector<8xf32>
    %10 = vector.multi_reduction <add>, %9, %cst_6 [1] : vector<8x32xf32> to vector<8xf32>
    %cst_7 = arith.constant 5.000000e-01 : f32
    %11 = vector.broadcast %cst_7 : f32 to vector<8xf32>
    %12 = arith.mulf %11, %10 : vector<8xf32>
    %cst_8 = arith.constant dense<0.000000e+00> : vector<8xf32>
    %13 = vector.multi_reduction <add>, %3, %cst_8 [0] : vector<4x8xf32> to vector<8xf32>
    %14 = vector.broadcast %4 : f32 to vector<8xf32>
    %15 = arith.addf %13, %14 : vector<8xf32>
    %16 = arith.addf %15, %12 : vector<8xf32>
    %17 = arith.negf %16 : vector<8xf32>
    %18 = math.exp %17 : vector<8xf32>
    %cst_9 = arith.constant 1.000000e+00 : f32
    %19 = vector.broadcast %cst_9 : f32 to vector<8xf32>
    %20 = arith.addf %19, %18 : vector<8xf32>
    %21 = arith.divf %19, %20 : vector<8xf32>
    %22 = vector.shape_cast %21 : vector<8xf32> to vector<1x8xf32>
    %c0_10 = arith.constant 0 : index
    %c0_11 = arith.constant 0 : index
    %23 = vector.load %arg4[%c0_10, %c0_11] : memref<1x8xf32, #tpu.memory_space<vmem>>, vector<1x8xf32>
    tpu.vector_store %arg4[%c0_10, %c0_11], %22 {strides = array<i32>} : memref<1x8xf32, #tpu.memory_space<vmem>>, vector<1x8xf32>,
    return
  }
  func.func @transform_0(%arg0: i32) -> (i32, i32, i32) {
    %c0_i32 = arith.constant 0 : i32
    %c0_i32_0 = arith.constant 0 : i32
    %c0_i32_1 = arith.constant 0 : i32
    return %c0_i32, %arg0, %c0_i32_0 : i32, i32, i32
  }
  func.func @transform_1(%arg0: i32) -> (i32, i32) {
    %c0_i32 = arith.constant 0 : i32
    %c0_i32_0 = arith.constant 0 : i32
    return %c0_i32, %arg0 : i32, i32
  }
  func.func @transform_2(%arg0: i32) -> i32 {
    %c0_i32 = arith.constant 0 : i32
    %c0_i32_0 = arith.constant 0 : i32
    return %c0_i32 : i32
  }
  func.func @transform_3(%arg0: i32) -> (i32, i32) {
    %c0_i32 = arith.constant 0 : i32
    %c0_i32_0 = arith.constant 0 : i32
    return %c0_i32, %arg0 : i32, i32
  }
}

</mosaic_0001>

<llo_original>
// kernel: fm_forward.1
$region0: #{fm_forward.1}
  #allocation0 [shape = 'u32[]', space=smem, size = 0x4, offset = 0x4, fixed_abs, tag = 'smem constant byte address 0x4 - core index']
  #allocation1 [shape = 'u32[144,128]{1,0:T(1,128)}', space=vmem, size = 0x12000, scoped, tag = 'internal scratch']
  #allocation2 [shape = 'f32[1]{0:T(128)S(6)}', space=smem, size = 0x200, scoped, tag = 'scoped memory for fm_forward.1']
  %s0 = inlined_call_operand.vmem [shape: bf16[4,8,32], index: 0, kind: input, shape index: {}]
  %s1 = inlined_call_operand.vmem [shape: bf16[4,8], index: 1, kind: input, shape index: {}]
  %s2 = inlined_call_operand.<no memory space> [shape: f32[1], index: 2, kind: input, shape index: {}]
  %s3 = inlined_call_operand.vmem [shape: f32[1,8], index: 3, kind: output, shape index: {}]
  %s4 = sld [smem:[#allocation0]]
  $region22: #{fm_forward.1} parent=0
    _
  %s6 = ssub.s32 1, %s4
  %s7 = scalar_select 0, %s6, %s4
  %8 = sst [smem:[#allocation2]] %s2
  // Predicated region
  $region2: #{fm_forward.1} parent=0 // pred_check
    _
  $region3: #{fm_forward.1} parent=0 // pred_check_branch
    %10 = sbr.rel (0) target = $region5
  $region4: #{fm_forward.1} parent=0 // pred_region
    _
  $region5: #{fm_forward.1} parent=0 // pred_fallthru
    _
  // Predicated region
  $region6: #{fm_forward.1} parent=0 // pred_check
    _
  $region7: #{fm_forward.1} parent=0 // pred_check_branch
    %12 = sbr.rel (0) target = $region9
  $region8: #{fm_forward.1} parent=0 // pred_region
    _
  $region9: #{fm_forward.1} parent=0 // pred_fallthru
    _
  // Predicated region
  $region10: #{fm_forward.1} parent=0 // pred_check
    _
  $region11: #{fm_forward.1} parent=0 // pred_check_branch
    %14 = sbr.rel (0) target = $region13
  $region12: #{fm_forward.1} parent=0 // pred_region
    _
  $region13: #{fm_forward.1} parent=0 // pred_fallthru
    _
  %v15 = vld [vmem:[%s0] sm:$0xf]
  %v16 = vld [vmem:[%s0 + $0x4] sm:$0xf]
  %v17 = vld [vmem:[%s0 + $0x8] sm:$0xf]
  %v18 = vld [vmem:[%s0 + $0xc] sm:$0xf]
  %v19 = vunpack.c.l.bf16 %v15
  %v20 = vunpack.c.l.bf16 %v16
  %v21 = vunpack.c.l.bf16 %v17
  %v22 = vunpack.c.l.bf16 %v18
  %v23 = vld [vmem:[%s1] sm:$0x3]
  %v24 = vunpack.c.l.bf16 %v23
  %s25 = sld [smem:[#allocation2]]
  %vm26 = vcmask 261120
  %v27 = vsel %vm26, %v19, 0.0
  %v28 = vsel %vm26, %v20, 0.0
  %v29 = vadd.f32 %v27, %v28
  %v30 = vsel %vm26, %v21, 0.0
  %v31 = vadd.f32 %v29, %v30
  %v32 = vsel %vm26, %v22, 0.0
  %v33 = vadd.f32 %v31, %v32
  %v34 = vmul.f32 %v19, %v19
  %v35 = vmul.f32 %v20, %v20
  %v36 = vmul.f32 %v21, %v21
  %v37 = vmul.f32 %v22, %v22
  %v38 = vsel %vm26, %v34, 0.0
  %v39 = vsel %vm26, %v35, 0.0
  %v40 = vadd.f32 %v38, %v39
  %v41 = vsel %vm26, %v36, 0.0
  %v42 = vadd.f32 %v40, %v41
  %v43 = vsel %vm26, %v37, 0.0
  %v44 = vadd.f32 %v42, %v43
  %v45 = vmul.f32 %v33, %v33
  %v46 = vsub.f32 %v45, %v44
  %v47 = vsel %vm26, %v46, 0.0
  %48 = vadd.xlane.f32.xlu0 %v47
  %v49 = vpop.xlane.xlu0 %48
  %v50 = vmul.f32 %v49, 0.5
  %vm51 = vcmask 60416
  %v52 = vsel %vm51, %v24, 0.0
  %v53 = vrot.slane %v52, 4
  %v54 = vadd.f32 %v52, %v53
  %v55 = vrot.slane %v54, 2
  %v56 = vadd.f32 %v54, %v55
  %v57 = vrot.slane %v56, 1
  %v58 = vadd.f32 %v56, %v57
  %v59 = vstv %s25
  %v60 = vadd.f32 %v58, %v59
  %v62 = vlaneseq
  %v63 = vand.u32 %v62, 127
  %v64 = vlaneseq
  %v65 = vshrl.u32 %v64, 7
  %v66 = vsub.s32 %v63, %v65
  %v67 = vrot.slane %v50, %v66
  %v69 = vadd.f32 %v60, %v67
  %v70 = vxor.u32 %v69, 2147483648
  %v71 = vmul.f32 %v70, 1.442695
  %v72 = vpow.pop %v71
  %v73 = vadd.f32 %v72, 1.0
  %v74 = vrcp.pop %v73
  %v75 = vmul.f32 1.0, %v74
  %vm76 = vcmask 57344
  %77 = vst.msk [vmem:[%s3] sm:$0x1] %vm76, %v75
  // Predicated region
  $region14: #{fm_forward.1} parent=0 // pred_check
    _
  $region15: #{fm_forward.1} parent=0 // pred_check_branch
    %79 = sbr.rel (0) target = $region17
  $region16: #{fm_forward.1} parent=0 // pred_region
    _
  $region17: #{fm_forward.1} parent=0 // pred_fallthru
    _
  // Predicated region
  $region18: #{fm_forward.1} parent=0 // pred_check
    _
  $region19: #{fm_forward.1} parent=0 // pred_check_branch
    %81 = sbr.rel (0) target = $region21
  $region20: #{fm_forward.1} parent=0 // pred_region
    _
  $region21: #{fm_forward.1} parent=0 // pred_fallthru
    _

</llo_original>
